<compile_context>
chip_gen: v5e
topology: v5e:2x2
jax: 0.10.0
libtpu: 0.0.40
codegen_flags: <defaults>
</compile_context>

<pallas_src>
import jax
import jax.numpy as jnp
from jax.experimental import pallas as pl
from jax.experimental.pallas import tpu as pltpu

NUM_LAYERS = 6
LAYER_DIMS = [(2, 3), (3, 3), (3, 3), (3, 3), (3, 3), (3, 3)]  # (in, out) per layer
IN_DIM = LAYER_DIMS[0][0]      # 2
OUT_DIM = LAYER_DIMS[-1][1]    # 3

_MAX_TILE_B = 8192             # batch rows per grid step (HBM-stream vs. step-overhead sweet spot)
_JNP_FAST_PATH_MAX_B = 4096    # below this, plain fused XLA beats pallas_call dispatch cost


def _double_input_kernel(w_ref, b_ref, x_ref, y_ref, o_ref):
    """out[:, :3] = x @ W_eff + b_eff ; out[:, 3:] = y @ W_eff + b_eff.

    W_eff / b_eff are the trace-time composition of the 6 affine layers and live in SMEM;
    the tiny (K=2, N=3) matmul is an unrolled VPU broadcast-FMA, so the kernel is a pure
    HBM->VMEM->HBM stream with a handful of VALU ops (no MXU, no operand VMEM tiles).
    """
    x0 = x_ref[:, 0:1]
    x1 = x_ref[:, 1:2]
    y0 = y_ref[:, 0:1]
    y1 = y_ref[:, 1:2]
    for j in range(OUT_DIM):                 # unrolled at trace time (3 output cols per half)
        w0 = w_ref[0, j]                     # SMEM scalar reads
        w1 = w_ref[1, j]
        bj = b_ref[0, j]
        o_ref[:, j:j + 1] = w0 * x0 + w1 * x1 + bj                          # mlp(x) half
        o_ref[:, OUT_DIM + j:OUT_DIM + j + 1] = w0 * y0 + w1 * y1 + bj      # mlp(y) half


def _compose_affine(weights, biases):
    """h@W0+b0 ... @W5+b5  ==  h@W_eff + b_eff.

    Valid ONLY while every layer stays purely affine (the torch module has no
    nonlinearities) -- revisit the whole kernel design if that ever changes.
    """
    w_eff, b_eff = weights[0], biases[0]
    for w, b in zip(weights[1:], biases[1:]):
        w_eff = w_eff @ w            # (2, 3)
        b_eff = b_eff @ w + b        # (1, 3)
    return w_eff, b_eff


def _pick_tile(batch):
    """Tile rows per grid step. Multiple of 8 (BlockSpec rule) unless it equals the batch;
    for large batches, at least 2 grid steps so v7x's two TensorCores both get work."""
    if batch <= 16:
        return batch                                   # single whole-array block
    half = (batch + 1) // 2
    return min(_MAX_TILE_B, ((half + 7) // 8) * 8)


@jax.jit
def double_input_pallas(x, y, weights, biases):
    """Pallas forward of _DoubleInput: cat(mlp(x), mlp(y), dim=1) -> (B, 6)."""
    assert x.shape == y.shape and x.shape[1] == IN_DIM, (x.shape, y.shape)
    batch = x.shape[0]
    x = x.astype(jnp.float32)
    y = y.astype(jnp.float32)

    # trace-time precomposition of the 6 affine layers (tiny jnp ops outside the kernel)
    w_eff, b_eff = _compose_affine(weights, biases)    # (2, 3), (1, 3)

    tile_b = _pick_tile(batch)
    grid = (pl.cdiv(batch, tile_b),)                   # ragged last tile handled by Pallas

    return pl.pallas_call(
        _double_input_kernel,
        out_shape=jax.ShapeDtypeStruct((batch, 2 * OUT_DIM), jnp.float32),
        grid=grid,
        in_specs=[
            pl.BlockSpec(memory_space=pltpu.MemorySpace.SMEM),     # W_eff (2, 3) scalars
            pl.BlockSpec(memory_space=pltpu.MemorySpace.SMEM),     # b_eff (1, 3) scalars
            pl.BlockSpec((tile_b, IN_DIM), lambda i: (i, 0)),      # x tile
            pl.BlockSpec((tile_b, IN_DIM), lambda i: (i, 0)),      # y tile
        ],
        out_specs=pl.BlockSpec((tile_b, 2 * OUT_DIM), lambda i: (i, 0)),
        compiler_params=pltpu.CompilerParams(
            dimension_semantics=("parallel",),          # batch steps shard across v7x's 2 TCs
            # 3 lane-padded buffers x double-buffering at tile_b=8192 ~= 24 MiB
            vmem_limit_bytes=40 * 1024 * 1024,
        ),
    )(w_eff, b_eff, x, y)


@jax.jit
def _double_input_jnp(x, y, weights, biases):
    """Plain fused-XLA path for tiny batches (layer-by-layer, exact module semantics)."""
    def mlp(h):
        for w, b in zip(weights, biases):
            h = h @ w + b
        return h
    return jnp.concatenate([mlp(x), mlp(y)], axis=1)


def double_input_forward(x, y, weights, biases):
    """Public forward of _DoubleInput. Tiny batches take the jnp fast path (pallas_call
    dispatch would dominate at B~8); larger batches run the Pallas kernel."""
    if x.shape[0] <= _JNP_FAST_PATH_MAX_B:
        return _double_input_jnp(x, y, weights, biases)
    return double_input_pallas(x, y, weights, biases)


def init_params(key):
    """PyTorch-Linear-style init: U(-1/sqrt(fan_in), 1/sqrt(fan_in)).

    Weights stored as (in_features, out_features) (W.T of torch layout);
    biases stored as (1, out_features).
    """
    weights, biases = [], []
    for (fan_in, fan_out) in LAYER_DIMS:
        key, kw, kb = jax.random.split(key, 3)
        bound = 1.0 / jnp.sqrt(float(fan_in))
        weights.append(jax.random.uniform(kw, (fan_in, fan_out), jnp.float32, -bound, bound))
        biases.append(jax.random.uniform(kb, (1, fan_out), jnp.float32, -bound, bound))
    return weights, biases


def reference_forward(x, y, weights, biases):
    """Pure-JAX layer-by-layer reference (matches the PyTorch module exactly)."""
    def mlp(h):
        for w, b in zip(weights, biases):
            h = h @ w + b
        return h
    return jnp.concatenate([mlp(x), mlp(y)], axis=1)


if __name__ == "__main__":
    key = jax.random.PRNGKey(0)
    key, kx, ky, kp = jax.random.split(key, 4)
    weights, biases = init_params(kp)

    # --- module-native tiny batch, run straight through the Pallas kernel ---
    B = 8
    x = jax.random.normal(kx, (B, IN_DIM), jnp.float32)
    y = jax.random.normal(ky, (B, IN_DIM), jnp.float32)
    out = jax.block_until_ready(double_input_pallas(x, y, weights, biases))
    ref = reference_forward(x, y, weights, biases)
    assert out.shape == (B, 2 * OUT_DIM), out.shape
    # precomposed affine map changes rounding order vs layer-by-layer -> tolerance check
    assert jnp.allclose(out, ref, atol=1e-5, rtol=1e-5), "pallas (B=8) mismatch vs reference"

    # --- larger, non-divisible batch: exercises multi-step grid + ragged last tile ---
    key, kx2, ky2 = jax.random.split(key, 3)
    B2 = 2056                      # tile 1032 -> grid 2, last tile has 8 out-of-bounds rows
    x2 = jax.random.normal(kx2, (B2, IN_DIM), jnp.float32)
    y2 = jax.random.normal(ky2, (B2, IN_DIM), jnp.float32)
    out2 = jax.block_until_ready(double_input_pallas(x2, y2, weights, biases))
    ref2 = reference_forward(x2, y2, weights, biases)
    assert out2.shape == (B2, 2 * OUT_DIM), out2.shape
    assert jnp.allclose(out2, ref2, atol=1e-5, rtol=1e-5), "pallas (ragged) mismatch vs reference"

    # --- public wrapper fast path at the module's native scale ---
    out_fast = jax.block_until_ready(double_input_forward(x, y, weights, biases))
    assert jnp.allclose(out_fast, ref, atol=1e-6, rtol=1e-6), "jnp fast path mismatch"

    print("KERNEL_OK")
</pallas_src>

<mosaic_0001>
module attributes {stable_mosaic.version = 11 : i64} {
  func.func @_double_input_kernel(%arg0: i32, %arg1: memref<2x3xf32, #tpu.memory_space<smem>>, %arg2: memref<1x3xf32, #tpu.memory_space<smem>>, %arg3: memref<8x2xf32, #tpu.memory_space<vmem>>, %arg4: memref<8x2xf32, #tpu.memory_space<vmem>>, %arg5: memref<8x6xf32, #tpu.memory_space<vmem>>) attributes {dimension_semantics = [#tpu.dimension_semantics<parallel>], iteration_bounds = array<i64: 1>, scalar_prefetch = 0 : i64, scratch_operands = 0 : i64, tpu.core_type = #tpu.core_type<tc>, window_params = [{transform_indices = @transform_0, window_bounds = array<i64: 2, 3>}, {transform_indices = @transform_1, window_bounds = array<i64: 1, 3>}, {transform_indices = @transform_2, window_bounds = array<i64: 8, 2>}, {transform_indices = @transform_3, window_bounds = array<i64: 8, 2>}, {transform_indices = @transform_4, window_bounds = array<i64: 8, 6>}]} {
    %c0 = arith.constant 0 : index
    %c0_0 = arith.constant 0 : index
    %0 = vector.load %arg3[%c0, %c0_0] : memref<8x2xf32, #tpu.memory_space<vmem>>, vector<8x1xf32>
    %c0_1 = arith.constant 0 : index
    %c1 = arith.constant 1 : index
    %1 = vector.load %arg3[%c0_1, %c1] : memref<8x2xf32, #tpu.memory_space<vmem>>, vector<8x1xf32>
    %c0_2 = arith.constant 0 : index
    %c0_3 = arith.constant 0 : index
    %2 = vector.load %arg4[%c0_2, %c0_3] : memref<8x2xf32, #tpu.memory_space<vmem>>, vector<8x1xf32>
    %c0_4 = arith.constant 0 : index
    %c1_5 = arith.constant 1 : index
    %3 = vector.load %arg4[%c0_4, %c1_5] : memref<8x2xf32, #tpu.memory_space<vmem>>, vector<8x1xf32>
    %c0_6 = arith.constant 0 : index
    %c0_7 = arith.constant 0 : index
    %4 = memref.load %arg1[%c0_6, %c0_7] : memref<2x3xf32, #tpu.memory_space<smem>>
    %c1_8 = arith.constant 1 : index
    %c0_9 = arith.constant 0 : index
    %5 = memref.load %arg1[%c1_8, %c0_9] : memref<2x3xf32, #tpu.memory_space<smem>>
    %c0_10 = arith.constant 0 : index
    %c0_11 = arith.constant 0 : index
    %6 = memref.load %arg2[%c0_10, %c0_11] : memref<1x3xf32, #tpu.memory_space<smem>>
    %7 = vector.broadcast %4 : f32 to vector<8x1xf32>
    %8 = arith.mulf %7, %0 : vector<8x1xf32>
    %9 = vector.broadcast %5 : f32 to vector<8x1xf32>
    %10 = arith.mulf %9, %1 : vector<8x1xf32>
    %11 = arith.addf %8, %10 : vector<8x1xf32>
    %12 = vector.broadcast %6 : f32 to vector<8x1xf32>
    %13 = arith.addf %11, %12 : vector<8x1xf32>
    %c0_12 = arith.constant 0 : index
    %c0_13 = arith.constant 0 : index
    %14 = vector.load %arg5[%c0_12, %c0_13] : memref<8x6xf32, #tpu.memory_space<vmem>>, vector<8x1xf32>
    tpu.vector_store %arg5[%c0_12, %c0_13], %13 {strides = array<i32>} : memref<8x6xf32, #tpu.memory_space<vmem>>, vector<8x1xf32>,
    %15 = vector.broadcast %4 : f32 to vector<8x1xf32>
    %16 = arith.mulf %15, %2 : vector<8x1xf32>
    %17 = vector.broadcast %5 : f32 to vector<8x1xf32>
    %18 = arith.mulf %17, %3 : vector<8x1xf32>
    %19 = arith.addf %16, %18 : vector<8x1xf32>
    %20 = vector.broadcast %6 : f32 to vector<8x1xf32>
    %21 = arith.addf %19, %20 : vector<8x1xf32>
    %c0_14 = arith.constant 0 : index
    %c3 = arith.constant 3 : index
    %22 = vector.load %arg5[%c0_14, %c3] : memref<8x6xf32, #tpu.memory_space<vmem>>, vector<8x1xf32>
    tpu.vector_store %arg5[%c0_14, %c3], %21 {strides = array<i32>} : memref<8x6xf32, #tpu.memory_space<vmem>>, vector<8x1xf32>,
    %c0_15 = arith.constant 0 : index
    %c1_16 = arith.constant 1 : index
    %23 = memref.load %arg1[%c0_15, %c1_16] : memref<2x3xf32, #tpu.memory_space<smem>>
    %c1_17 = arith.constant 1 : index
    %c1_18 = arith.constant 1 : index
    %24 = memref.load %arg1[%c1_17, %c1_18] : memref<2x3xf32, #tpu.memory_space<smem>>
    %c0_19 = arith.constant 0 : index
    %c1_20 = arith.constant 1 : index
    %25 = memref.load %arg2[%c0_19, %c1_20] : memref<1x3xf32, #tpu.memory_space<smem>>
    %26 = vector.broadcast %23 : f32 to vector<8x1xf32>
    %27 = arith.mulf %26, %0 : vector<8x1xf32>
    %28 = vector.broadcast %24 : f32 to vector<8x1xf32>
    %29 = arith.mulf %28, %1 : vector<8x1xf32>
    %30 = arith.addf %27, %29 : vector<8x1xf32>
    %31 = vector.broadcast %25 : f32 to vector<8x1xf32>
    %32 = arith.addf %30, %31 : vector<8x1xf32>
    %c0_21 = arith.constant 0 : index
    %c1_22 = arith.constant 1 : index
    %33 = vector.load %arg5[%c0_21, %c1_22] : memref<8x6xf32, #tpu.memory_space<vmem>>, vector<8x1xf32>
    tpu.vector_store %arg5[%c0_21, %c1_22], %32 {strides = array<i32>} : memref<8x6xf32, #tpu.memory_space<vmem>>, vector<8x1xf32>,
    %34 = vector.broadcast %23 : f32 to vector<8x1xf32>
    %35 = arith.mulf %34, %2 : vector<8x1xf32>
    %36 = vector.broadcast %24 : f32 to vector<8x1xf32>
    %37 = arith.mulf %36, %3 : vector<8x1xf32>
    %38 = arith.addf %35, %37 : vector<8x1xf32>
    %39 = vector.broadcast %25 : f32 to vector<8x1xf32>
    %40 = arith.addf %38, %39 : vector<8x1xf32>
    %c0_23 = arith.constant 0 : index
    %c4 = arith.constant 4 : index
    %41 = vector.load %arg5[%c0_23, %c4] : memref<8x6xf32, #tpu.memory_space<vmem>>, vector<8x1xf32>
    tpu.vector_store %arg5[%c0_23, %c4], %40 {strides = array<i32>} : memref<8x6xf32, #tpu.memory_space<vmem>>, vector<8x1xf32>,
    %c0_24 = arith.constant 0 : index
    %c2 = arith.constant 2 : index
    %42 = memref.load %arg1[%c0_24, %c2] : memref<2x3xf32, #tpu.memory_space<smem>>
    %c1_25 = arith.constant 1 : index
    %c2_26 = arith.constant 2 : index
    %43 = memref.load %arg1[%c1_25, %c2_26] : memref<2x3xf32, #tpu.memory_space<smem>>
    %c0_27 = arith.constant 0 : index
    %c2_28 = arith.constant 2 : index
    %44 = memref.load %arg2[%c0_27, %c2_28] : memref<1x3xf32, #tpu.memory_space<smem>>
    %45 = vector.broadcast %42 : f32 to vector<8x1xf32>
    %46 = arith.mulf %45, %0 : vector<8x1xf32>
    %47 = vector.broadcast %43 : f32 to vector<8x1xf32>
    %48 = arith.mulf %47, %1 : vector<8x1xf32>
    %49 = arith.addf %46, %48 : vector<8x1xf32>
    %50 = vector.broadcast %44 : f32 to vector<8x1xf32>
    %51 = arith.addf %49, %50 : vector<8x1xf32>
    %c0_29 = arith.constant 0 : index
    %c2_30 = arith.constant 2 : index
    %52 = vector.load %arg5[%c0_29, %c2_30] : memref<8x6xf32, #tpu.memory_space<vmem>>, vector<8x1xf32>
    tpu.vector_store %arg5[%c0_29, %c2_30], %51 {strides = array<i32>} : memref<8x6xf32, #tpu.memory_space<vmem>>, vector<8x1xf32>,
    %53 = vector.broadcast %42 : f32 to vector<8x1xf32>
    %54 = arith.mulf %53, %2 : vector<8x1xf32>
    %55 = vector.broadcast %43 : f32 to vector<8x1xf32>
    %56 = arith.mulf %55, %3 : vector<8x1xf32>
    %57 = arith.addf %54, %56 : vector<8x1xf32>
    %58 = vector.broadcast %44 : f32 to vector<8x1xf32>
    %59 = arith.addf %57, %58 : vector<8x1xf32>
    %c0_31 = arith.constant 0 : index
    %c5 = arith.constant 5 : index
    %60 = vector.load %arg5[%c0_31, %c5] : memref<8x6xf32, #tpu.memory_space<vmem>>, vector<8x1xf32>
    tpu.vector_store %arg5[%c0_31, %c5], %59 {strides = array<i32>} : memref<8x6xf32, #tpu.memory_space<vmem>>, vector<8x1xf32>,
    return
  }
  func.func @transform_0(%arg0: i32) -> (i32, i32) {
    %c0_i32 = arith.constant 0 : i32
    %c0_i32_0 = arith.constant 0 : i32
    %c0_i32_1 = arith.constant 0 : i32
    return %c0_i32, %c0_i32_0 : i32, i32
  }
  func.func @transform_1(%arg0: i32) -> (i32, i32) {
    %c0_i32 = arith.constant 0 : i32
    %c0_i32_0 = arith.constant 0 : i32
    %c0_i32_1 = arith.constant 0 : i32
    return %c0_i32, %c0_i32_0 : i32, i32
  }
  func.func @transform_2(%arg0: i32) -> (i32, i32) {
    %c0_i32 = arith.constant 0 : i32
    %c0_i32_0 = arith.constant 0 : i32
    return %arg0, %c0_i32 : i32, i32
  }
  func.func @transform_3(%arg0: i32) -> (i32, i32) {
    %c0_i32 = arith.constant 0 : i32
    %c0_i32_0 = arith.constant 0 : i32
    return %arg0, %c0_i32 : i32, i32
  }
  func.func @transform_4(%arg0: i32) -> (i32, i32) {
    %c0_i32 = arith.constant 0 : i32
    %c0_i32_0 = arith.constant 0 : i32
    return %arg0, %c0_i32 : i32, i32
  }
}

</mosaic_0001>

<llo_original>
// kernel: double_input_pallas.1
$region0: #{double_input_pallas.1}
  #allocation0 [shape = 'u32[]', space=smem, size = 0x4, offset = 0x4, fixed_abs, tag = 'smem constant byte address 0x4 - core index']
  #allocation1 [shape = 'u32[72,128]{1,0:T(1,128)}', space=vmem, size = 0x9000, scoped, tag = 'internal scratch']
  %s0 = inlined_call_operand.vmem [shape: f32[2,3], index: 0, kind: input, shape index: {}]
  %s1 = inlined_call_operand.vmem [shape: f32[1,3], index: 1, kind: input, shape index: {}]
  %s2 = inlined_call_operand.vmem [shape: f32[8,2], index: 2, kind: input, shape index: {}]
  %s3 = inlined_call_operand.vmem [shape: f32[8,2], index: 3, kind: input, shape index: {}]
  %s4 = inlined_call_operand.hbm [shape: f32[8,6], index: 4, kind: output, shape index: {}]
  %s5 = sld [smem:[#allocation0]]
  $region34: #{double_input_pallas.1} parent=0
    _
  %s7 = ssub.s32 1, %s5
  %s8 = scalar_select 0, %s7, %s5
  $region1: #{double_input_pallas.1} parent=0
    #allocation2 [shape = 'u8[1024]{0}', space=smem, size = 0x400, scoped, tag = 'input window, operand 0, single buffered']
    #allocation3 [shape = 's32[1]{0}', space=sflag, size = 0x4, scoped, tag = 'scoped memory for double_input_pallas.1']
    #allocation4 [shape = 's32[1]{0}', space=sflag, size = 0x4, scoped, tag = 'scoped memory for double_input_pallas.1']
    #allocation5 [shape = 'u8[512]{0}', space=smem, size = 0x200, scoped, tag = 'input window, operand 1, single buffered']
    #allocation6 [shape = 's32[1]{0}', space=sflag, size = 0x4, scoped, tag = 'scoped memory for double_input_pallas.1']
    #allocation7 [shape = 'u8[4096]{0}', space=vmem, size = 0x1000, scoped, tag = 'output window, operand 0, single buffered']
    %9 = vsyncpa [#allocation4], 0
    %10 = vsyncpa [#allocation6], 0
    %11 = vsyncpa [#allocation3], 0
    // Predicated region
    $region2: #{double_input_pallas.1} parent=1 // pred_check
      _
    $region3: #{double_input_pallas.1} parent=1 // pred_check_branch
      %13 = sbr.rel (0) target = $region5
    $region4: #{double_input_pallas.1} parent=1 // pred_region
      %15 = vsyncadd [#allocation4], 0
      %s17 = sshll.u32 %s0, 4
      %s18 = int_to_ptr.vmem [resolvable:$true] %s17
      %20 = dma.vmem_to_smem %s18, 32, [#allocation2], [#allocation4]
    $region5: #{double_input_pallas.1} parent=1 // pred_fallthru
      _
    // Predicated region
    $region6: #{double_input_pallas.1} parent=1 // pred_check
      _
    $region7: #{double_input_pallas.1} parent=1 // pred_check_branch
      %22 = sbr.rel (0) target = $region9
    $region8: #{double_input_pallas.1} parent=1 // pred_region
      %24 = vsyncadd [#allocation6], 0
      %s26 = sshll.u32 %s1, 4
      %s27 = int_to_ptr.vmem [resolvable:$true] %s26
      %29 = dma.vmem_to_smem %s27, 16, [#allocation5], [#allocation6]
    $region9: #{double_input_pallas.1} parent=1 // pred_fallthru
      _
    // Predicated region
    $region10: #{double_input_pallas.1} parent=1 // pred_check
      _
    $region11: #{double_input_pallas.1} parent=1 // pred_check_branch
      %31 = sbr.rel (0) target = $region13
    $region12: #{double_input_pallas.1} parent=1 // pred_region
      _
    $region13: #{double_input_pallas.1} parent=1 // pred_fallthru
      _
    // Predicated region
    $region14: #{double_input_pallas.1} parent=1 // pred_check
      _
    $region15: #{double_input_pallas.1} parent=1 // pred_check_branch
      %33 = sbr.rel (0) target = $region17
    $region16: #{double_input_pallas.1} parent=1 // pred_region
      _
    $region17: #{double_input_pallas.1} parent=1 // pred_fallthru
      _
    // Predicated region
    $region18: #{double_input_pallas.1} parent=1 // pred_check
      _
    $region19: #{double_input_pallas.1} parent=1 // pred_check_branch
      %35 = sbr.rel (0) target = $region21
    $region20: #{double_input_pallas.1} parent=1 // pred_region
      %37 = dma.done [#allocation4], 32
    $region21: #{double_input_pallas.1} parent=1 // pred_fallthru
      _
    // Predicated region
    $region22: #{double_input_pallas.1} parent=1 // pred_check
      _
    $region23: #{double_input_pallas.1} parent=1 // pred_check_branch
      %39 = sbr.rel (0) target = $region25
    $region24: #{double_input_pallas.1} parent=1 // pred_region
      %41 = dma.done [#allocation6], 16
    $region25: #{double_input_pallas.1} parent=1 // pred_fallthru
      _
    %42 = sfence
    %v43 = vld [vmem:[%s2] sm:$0xff]
    %v44 = vld [vmem:[%s3] sm:$0xff]
    %s45 = sld [smem:[#allocation2]]
    %s46 = sld [smem:[#allocation2 + $0x80]]
    %s47 = sld [smem:[#allocation5]]
    %v48 = vstv %s45
    %v49 = vmul.f32 %v48, %v43
    %v50 = vstv %s46
    %v51 = vmul.f32 %v50, %v43
    %53 = vrot.lane.b32.xlu0 %v51, 127
    %v54 = vpop.permute.xlu0 %53
    %v56 = vadd.f32 %v49, %v54
    %v57 = vstv %s47
    %v58 = vadd.f32 %v56, %v57
    %vm59 = vcmask 7168
    %60 = vst.msk [vmem:[#allocation7] sm:$0xff] %vm59, %v58
    %v61 = vmul.f32 %v48, %v44
    %v62 = vmul.f32 %v50, %v44
    %64 = vrot.lane.b32.xlu0 %v62, 127
    %v65 = vpop.permute.xlu0 %64
    %v67 = vadd.f32 %v61, %v65
    %v68 = vadd.f32 %v67, %v57
    %70 = vrot.lane.b32.xlu0 %v68, 3
    %v71 = vpop.permute.xlu0 %70
    %vm73 = vcmask 31768
    %74 = vst.msk [vmem:[#allocation7] sm:$0xff] %vm73, %v71
    %s75 = sld [smem:[#allocation2 + $0x1]]
    %s76 = sld [smem:[#allocation2 + $0x81]]
    %s77 = sld [smem:[#allocation5 + $0x1]]
    %v78 = vstv %s75
    %v79 = vmul.f32 %v78, %v43
    %v80 = vstv %s76
    %v81 = vmul.f32 %v80, %v43
    %83 = vrot.lane.b32.xlu0 %v81, 127
    %v84 = vpop.permute.xlu0 %83
    %v86 = vadd.f32 %v79, %v84
    %v87 = vstv %s77
    %v88 = vadd.f32 %v86, %v87
    %90 = vrot.lane.b32.xlu0 %v88, 1
    %v91 = vpop.permute.xlu0 %90
    %vm93 = vcmask 15368
    %94 = vst.msk [vmem:[#allocation7] sm:$0xff] %vm93, %v91
    %v95 = vmul.f32 %v78, %v44
    %v96 = vmul.f32 %v80, %v44
    %98 = vrot.lane.b32.xlu0 %v96, 127
    %v99 = vpop.permute.xlu0 %98
    %v101 = vadd.f32 %v95, %v99
    %v102 = vadd.f32 %v101, %v87
    %104 = vrot.lane.b32.xlu0 %v102, 4
    %v105 = vpop.permute.xlu0 %104
    %vm107 = vcmask 39968
    %108 = vst.msk [vmem:[#allocation7] sm:$0xff] %vm107, %v105
    %s109 = sld [smem:[#allocation2 + $0x2]]
    %s110 = sld [smem:[#allocation2 + $0x82]]
    %s111 = sld [smem:[#allocation5 + $0x2]]
    %v112 = vstv %s109
    %v113 = vmul.f32 %v112, %v43
    %v114 = vstv %s110
    %v115 = vmul.f32 %v114, %v43
    %117 = vrot.lane.b32.xlu0 %v115, 127
    %v118 = vpop.permute.xlu0 %117
    %v120 = vadd.f32 %v113, %v118
    %v121 = vstv %s111
    %v122 = vadd.f32 %v120, %v121
    %124 = vrot.lane.b32.xlu0 %v122, 2
    %v125 = vpop.permute.xlu0 %124
    %vm127 = vcmask 23568
    %128 = vst.msk [vmem:[#allocation7] sm:$0xff] %vm127, %v125
    %v129 = vmul.f32 %v112, %v44
    %v130 = vmul.f32 %v114, %v44
    %132 = vrot.lane.b32.xlu0 %v130, 127
    %v133 = vpop.permute.xlu0 %132
    %v135 = vadd.f32 %v129, %v133
    %v136 = vadd.f32 %v135, %v121
    %138 = vrot.lane.b32.xlu0 %v136, 5
    %v139 = vpop.permute.xlu0 %138
    %vm141 = vcmask 48168
    %142 = vst.msk [vmem:[#allocation7] sm:$0xff] %vm141, %v139
    // Predicated region
    $region26: #{double_input_pallas.1} parent=1 // pred_check
      _
    $region27: #{double_input_pallas.1} parent=1 // pred_check_branch
      %144 = sbr.rel (0) target = $region29
    $region28: #{double_input_pallas.1} parent=1 // pred_region
      %146 = vsyncadd [#allocation3], 0
      %s148 = sshll.u32 [#allocation7], 4
      %s149 = int_to_ptr.vmem [resolvable:$true] %s148
      %s150 = sshll.u32 %s4, 4
      %s151 = int_to_ptr.hbm [resolvable:$true] %s150
      %153 = dma.vmem_to_hbm [thread:$0]  %s149, 128, %s151, [#allocation3]
    $region29: #{double_input_pallas.1} parent=1 // pred_fallthru
      _
    // Predicated region
    $region30: #{double_input_pallas.1} parent=1 // pred_check
      _
    $region31: #{double_input_pallas.1} parent=1 // pred_check_branch
      %155 = sbr.rel (0) target = $region33
    $region32: #{double_input_pallas.1} parent=1 // pred_region
      %157 = dma.done [#allocation3], 128
    $region33: #{double_input_pallas.1} parent=1 // pred_fallthru
      _
    %158 = vsyncpa [#allocation3], 1
    %159 = vsyncpa [#allocation4], 1
    %160 = vsyncpa [#allocation6], 1

</llo_original>
